<compile_context>
chip_gen: v7x
topology: tpu7x:2x2x1
jax: 0.10.0
libtpu: 0.0.40
codegen_flags: <defaults>
</compile_context>

<pallas_src>
import functools

import jax
import jax.numpy as jnp
from jax.experimental import pallas as pl
from jax.experimental.pallas import tpu as pltpu

_ALPHA = 0.25      # focal_loss default
_SMOOTH = 1e-6     # dice_loss default
_N_STATS = 6       # per-row: [bce_sum, focal_sum, align_sum, inter, prob_sum, tgt_sum]
_STAT_LANES = 128  # each stat occupies one 128-lane group -> unmasked, lane-dense stores
_OUT_W = _N_STATS * _STAT_LANES


def _loss_kernel(seg_ref, tgt_ref, att_ref, out_ref, *, col_steps, valid_cols):
    """Accumulate per-row partial sums for one (TILE_R, TILE_S) input tile.

    out_ref is a (1, TILE_R, 6*128) f32 block resident across the innermost
    (column) grid axis; each of the 6 stats lives in its own 128-lane group.
    """
    j = pl.program_id(2)

    @pl.when(j == 0)
    def _init():
        out_ref[...] = jnp.zeros_like(out_ref)

    seg = seg_ref[...].astype(jnp.float32)   # logits
    tgt = tgt_ref[...].astype(jnp.float32)   # {0,1} targets
    att = att_ref[...].astype(jnp.float32)   # attention, resized to seg's (H, W)
    tile_r, tile_s = seg.shape

    # Numerically stable BCE with logits: max(x,0) - x*t + log1p(exp(-|x|)).
    e = jnp.exp(-jnp.abs(seg))
    bce = jnp.maximum(seg, 0.0) - seg * tgt + jnp.log1p(e)

    # sigmoid(x) from the same exp: 1/(1+e) via EUP reciprocal + one Newton step.
    xp1 = 1.0 + e
    r = pl.reciprocal(xp1, approx=True)
    r = r * (2.0 - xp1 * r)                  # Newton refinement -> ~f32 accuracy
    prob = jnp.where(seg >= 0.0, r, e * r)

    # Focal: for hard {0,1} targets, (1 - exp(-bce))^2 == (prob - tgt)^2.
    # TODO(synk): if soft (non-{0,1}) targets are ever used, revert to exp(-bce).
    d = prob - tgt
    focal = _ALPHA * (d * d) * bce

    adiff = att - prob
    sq = adiff * adiff                       # alignment MSE contribution
    inter = prob * tgt                       # dice intersection contribution

    if valid_cols is not None:
        # Mask the zero-padded tail lanes (cols was padded up to a 128 multiple).
        p = pl.program_id(1)
        col = (jax.lax.broadcasted_iota(jnp.int32, (tile_r, tile_s), 1)
               + (p * col_steps + j) * tile_s)
        mask = (col < valid_cols).astype(jnp.float32)
        bce, focal, sq = bce * mask, focal * mask, sq * mask
        inter, prob, tgt = inter * mask, prob * mask, tgt * mask

    groups = tile_s // _STAT_LANES

    def lane_sum(v):  # (tile_r, tile_s) -> (tile_r, 128) per-lane-group partial sums
        return v.reshape(tile_r, groups, _STAT_LANES).sum(axis=1)

    for k, v in enumerate((bce, focal, sq, inter, prob, tgt)):
        out_ref[0, :, k * _STAT_LANES:(k + 1) * _STAT_LANES] += lane_sum(v)


def _vmem_limit_bytes():
    """Per-generation scoped-VMEM limit (75% of physical, capped at 96 MiB)."""
    cap = 128 * 1024 * 1024
    try:
        info = pltpu.get_tpu_info()
        cap = int(getattr(info, "vmem_capacity_bytes", cap) or cap)
    except Exception:
        pass
    return min(cap * 3 // 4, 96 * 1024 * 1024)


def _choose_tiles(rows, cols_p, max_tile_elems=1 << 20):
    """Pick (tile_r, tile_s); cols_p is already a multiple of 128."""
    # Row tile: multiple of 8 dividing rows; prefer >= 2 grid steps on the
    # parallel row axis (v7x 2-TC / megacore) when rows allow.
    if rows % 8 == 0:
        if rows >= 16:
            tile_r = (rows // 2) - ((rows // 2) % 8)
            while tile_r > 8 and rows % tile_r:
                tile_r -= 8
            if tile_r < 8 or rows % tile_r:
                tile_r = 8
        else:
            tile_r = rows
    else:
        tile_r = rows                       # block == full dim is always legal
    # Column tile: largest 128-multiple dividing cols_p under the element budget
    # (~1M elems => ~2 MiB per bf16 input block; 3 inputs x 2 buffers ~ 12 MiB).
    target = max(_STAT_LANES,
                 (max_tile_elems // max(tile_r, 1)) // _STAT_LANES * _STAT_LANES)
    tile_s = cols_p
    c = min(cols_p, target)
    c -= c % _STAT_LANES
    while c >= _STAT_LANES:
        if cols_p % c == 0:
            tile_s = c
            break
        c -= _STAT_LANES
    return tile_r, tile_s


def _loss_stats(seg2d, tgt2d, att2d, tile_r, tile_s, valid_cols):
    rows, cols_p = seg2d.shape
    assert rows % tile_r == 0 and cols_p % tile_s == 0, "tiles must divide shape"
    row_steps = rows // tile_r
    col_total = cols_p // tile_s
    # When the parallel row axis has a single step, split the column range in
    # two parallel halves so both TensorCores (v7x) / megacore halves get work.
    col_splits = 2 if (row_steps == 1 and col_total >= 2 and col_total % 2 == 0) else 1
    col_steps = col_total // col_splits

    kernel = functools.partial(
        _loss_kernel, col_steps=col_steps,
        valid_cols=None if valid_cols == cols_p else valid_cols)

    in_spec = pl.BlockSpec((tile_r, tile_s),
                           lambda i, p, j: (i, p * col_steps + j))
    out_spec = pl.BlockSpec((1, tile_r, _OUT_W), lambda i, p, j: (p, i, 0))

    return pl.pallas_call(
        kernel,
        out_shape=jax.ShapeDtypeStruct((col_splits, rows, _OUT_W), jnp.float32),
        grid=(row_steps, col_splits, col_steps),
        in_specs=[in_spec, in_spec, in_spec],
        out_specs=out_spec,
        compiler_params=pltpu.CompilerParams(
            dimension_semantics=("parallel", "parallel", "arbitrary"),
            vmem_limit_bytes=_vmem_limit_bytes()),
    )(seg2d, tgt2d, att2d)


def improved_combined_loss(predictions, targets, epoch=0, total_epochs=100,
                           seg_weight=1.0, attention_weight=0.5,
                           dice_weight=0.3, bce_weight=0.7,
                           use_focal_loss=True, tile_r=None, tile_s=None):
    """JAX/Pallas equivalent of ImprovedCombinedLoss.forward."""
    seg = predictions['segmentation']      # (N, C, H, W) logits, any float dtype
    att = predictions['attention']         # (N, C, h, w)
    tgt = targets                          # (N, C, H, W), {0,1}

    N, C, H, W = seg.shape
    if att.shape != seg.shape:
        # F.interpolate(mode='bilinear', align_corners=False) equivalent,
        # done in the input dtype to avoid a full-res f32 HBM round trip.
        # (PyTorch does this in f32; bf16 here costs ~1e-3 relative precision.)
        att_resized = jax.image.resize(att, (N, C, H, W), method='bilinear')
    else:
        att_resized = att

    rows, cols = N * C, H * W
    seg2d = seg.reshape(rows, cols)
    tgt2d = tgt.reshape(rows, cols)
    att2d = att_resized.reshape(rows, cols)

    # Pad the column axis up to a 128 multiple; the kernel masks the tail lanes.
    cols_p = pl.cdiv(cols, _STAT_LANES) * _STAT_LANES
    if cols_p != cols:
        pad = ((0, 0), (0, cols_p - cols))
        seg2d = jnp.pad(seg2d, pad)
        tgt2d = jnp.pad(tgt2d, pad)
        att2d = jnp.pad(att2d, pad)

    if tile_r is None or tile_s is None:
        auto_r, auto_s = _choose_tiles(rows, cols_p)
        tile_r = auto_r if tile_r is None else tile_r
        tile_s = auto_s if tile_s is None else tile_s

    stats3 = _loss_stats(seg2d, tgt2d, att2d, tile_r, tile_s, cols)
    # (col_splits, rows, 6*128) -> (rows, 6): sum parallel splits + lane groups.
    stats = stats3.sum(axis=0).reshape(rows, _N_STATS, _STAT_LANES).sum(axis=-1)

    # Global (not block-local) element / row counts for the means.
    n_elem = float(rows * cols)
    col_sums = jnp.sum(stats[:, :3], axis=0)
    bce_mean = col_sums[0] / n_elem
    focal_mean = col_sums[1] / n_elem
    alignment_loss = col_sums[2] / n_elem
    inter, prob_sum, tgt_sum = stats[:, 3], stats[:, 4], stats[:, 5]
    dice = (2.0 * inter + _SMOOTH) / (prob_sum + tgt_sum + _SMOOTH)
    dice_loss = 1.0 - jnp.mean(dice)       # mean over the N*C (sample, channel) pairs

    bce_loss = focal_mean if use_focal_loss else bce_mean
    seg_loss = bce_weight * bce_loss + dice_weight * dice_loss
    total_loss = seg_weight * seg_loss
    loss_info = {'total_loss': total_loss,
                 'segmentation_loss': seg_loss,
                 'bce_loss': bce_loss,
                 'dice_loss': dice_loss}

    if 'attention_loss' in predictions:
        attention_supervision_loss = predictions['attention_loss']
        w = attention_weight * max(0.1, 1.0 - epoch / (total_epochs * 0.5))
        total_loss = total_loss + w * attention_supervision_loss
        loss_info['attention_supervision_loss'] = attention_supervision_loss
        loss_info['attention_weight'] = w
        loss_info['total_loss'] = total_loss

    alignment_weight = 0.1
    total_loss = total_loss + alignment_weight * alignment_loss
    loss_info['alignment_loss'] = alignment_loss
    loss_info['total_loss'] = total_loss
    return total_loss, loss_info


def _reference_components(seg, tgt, att_resized):
    """Pure-JAX reference of the four loss components (f32 math)."""
    seg = seg.astype(jnp.float32)
    tgt = tgt.astype(jnp.float32)
    att = att_resized.astype(jnp.float32)
    bce = jnp.maximum(seg, 0.0) - seg * tgt + jnp.log(1.0 + jnp.exp(-jnp.abs(seg)))
    pt = jnp.exp(-bce)
    focal = _ALPHA * (1.0 - pt) ** 2 * bce
    prob = jax.nn.sigmoid(seg)
    inter = jnp.sum(prob * tgt, axis=(2, 3))
    union = jnp.sum(prob, axis=(2, 3)) + jnp.sum(tgt, axis=(2, 3))
    dice = (2.0 * inter + _SMOOTH) / (union + _SMOOTH)
    align = jnp.mean((att - prob) ** 2)
    return jnp.mean(focal), jnp.mean(bce), 1.0 - jnp.mean(dice), align


def _run_case(key, shape, att_hw, tile_r=None, tile_s=None):
    N, C, H, W = shape
    k_seg, k_tgt, k_att = jax.random.split(key, 3)
    seg = jax.random.normal(k_seg, (N, C, H, W)).astype(jnp.bfloat16)
    tgt = (jax.random.uniform(k_tgt, (N, C, H, W)) > 0.5).astype(jnp.bfloat16)
    att = jax.random.uniform(k_att, (N, C, att_hw[0], att_hw[1])).astype(jnp.bfloat16)
    preds = {'segmentation': seg, 'attention': att,
             'attention_loss': jnp.float32(0.123)}

    total_loss, info = improved_combined_loss(
        preds, tgt, epoch=0, total_epochs=100, tile_r=tile_r, tile_s=tile_s)
    jax.block_until_ready(total_loss)

    if att.shape != seg.shape:
        att_rs = jax.image.resize(att, (N, C, H, W), method='bilinear')
    else:
        att_rs = att
    focal_r, bce_r, dice_r, align_r = _reference_components(seg, tgt, att_rs)
    ref_total = (1.0 * (0.7 * focal_r + 0.3 * dice_r)
                 + 0.5 * jnp.float32(0.123) + 0.1 * align_r)

    assert jnp.allclose(info['bce_loss'], focal_r, rtol=1e-3, atol=1e-5)
    assert jnp.allclose(info['dice_loss'], dice_r, rtol=1e-3, atol=1e-5)
    assert jnp.allclose(info['alignment_loss'], align_r, rtol=1e-3, atol=1e-5)
    assert jnp.allclose(total_loss, ref_total, rtol=1e-3, atol=1e-5)


if __name__ == "__main__":
    key = jax.random.PRNGKey(0)
    k0, k1, k2 = jax.random.split(key, 3)

    # 1) Explicit tiles: row axis has a single step -> exercises the parallel
    #    column-split path (two partial stat blocks summed in the epilogue).
    _run_case(k0, (2, 8, 16, 16), (8, 8), tile_r=16, tile_s=128)
    # 2) Auto tiles: 2 parallel row steps, column axis accumulated in place.
    _run_case(k1, (2, 8, 16, 16), (8, 8))
    # 3) H*W not a multiple of 128 -> padded columns + in-kernel lane masking.
    _run_case(k2, (2, 4, 10, 10), (5, 5))

    print("KERNEL_OK")
</pallas_src>

<mosaic_0001>
module attributes {stable_mosaic.version = 11 : i64} {
  func.func @_loss_kernel(%arg0: i32, %arg1: i32, %arg2: i32, %arg3: memref<16x128xbf16, #tpu.memory_space<vmem>>, %arg4: memref<16x128xbf16, #tpu.memory_space<vmem>>, %arg5: memref<16x128xbf16, #tpu.memory_space<vmem>>, %arg6: memref<1x16x768xf32, #tpu.memory_space<vmem>>) attributes {dimension_semantics = [#tpu.dimension_semantics<parallel>, #tpu.dimension_semantics<parallel>, #tpu.dimension_semantics<arbitrary>], iteration_bounds = array<i64: 1, 2, 1>, scalar_prefetch = 0 : i64, scratch_operands = 0 : i64, tpu.core_type = #tpu.core_type<tc>, window_params = [{transform_indices = @transform_0, window_bounds = array<i64: 16, 128>}, {transform_indices = @transform_1, window_bounds = array<i64: 16, 128>}, {transform_indices = @transform_2, window_bounds = array<i64: 16, 128>}, {transform_indices = @transform_3, window_bounds = array<i64: 1, 16, 768>}]} {
    %c0_i32 = arith.constant 0 : i32
    %0 = arith.cmpi eq, %arg2, %c0_i32 : i32
    %1 = arith.extui %0 : i1 to i32
    %c0_i32_0 = arith.constant 0 : i32
    %2 = arith.cmpi ne, %1, %c0_i32_0 : i32
    scf.if %2 {
      %cst_48 = arith.constant 0.000000e+00 : f32
      %86 = vector.broadcast %cst_48 : f32 to vector<1x16x768xf32>
      %c0_49 = arith.constant 0 : index
      %c0_50 = arith.constant 0 : index
      %c0_51 = arith.constant 0 : index
      %87 = vector.load %arg6[%c0_49, %c0_50, %c0_51] : memref<1x16x768xf32, #tpu.memory_space<vmem>>, vector<1x16x768xf32>
      tpu.vector_store %arg6[%c0_49, %c0_50, %c0_51], %86 {strides = array<i32>} : memref<1x16x768xf32, #tpu.memory_space<vmem>>, vector<1x16x768xf32>,
    } else {
    }
    %c0 = arith.constant 0 : index
    %c0_1 = arith.constant 0 : index
    %3 = vector.load %arg3[%c0, %c0_1] : memref<16x128xbf16, #tpu.memory_space<vmem>>, vector<16x128xbf16>
    %4 = arith.extf %3 : vector<16x128xbf16> to vector<16x128xf32>
    %c0_2 = arith.constant 0 : index
    %c0_3 = arith.constant 0 : index
    %5 = vector.load %arg4[%c0_2, %c0_3] : memref<16x128xbf16, #tpu.memory_space<vmem>>, vector<16x128xbf16>
    %6 = arith.extf %5 : vector<16x128xbf16> to vector<16x128xf32>
    %c0_4 = arith.constant 0 : index
    %c0_5 = arith.constant 0 : index
    %7 = vector.load %arg5[%c0_4, %c0_5] : memref<16x128xbf16, #tpu.memory_space<vmem>>, vector<16x128xbf16>
    %8 = arith.extf %7 : vector<16x128xbf16> to vector<16x128xf32>
    %9 = math.absf %4 : vector<16x128xf32>
    %cst = arith.constant 0.000000e+00 : f32
    %10 = vector.broadcast %cst : f32 to vector<16x128xf32>
    %11 = arith.subf %10, %9 : vector<16x128xf32>
    %12 = math.exp %11 : vector<16x128xf32>
    %cst_6 = arith.constant 0.000000e+00 : f32
    %13 = vector.broadcast %cst_6 : f32 to vector<16x128xf32>
    %14 = arith.maximumf %4, %13 : vector<16x128xf32>
    %15 = arith.mulf %4, %6 : vector<16x128xf32>
    %16 = arith.subf %14, %15 : vector<16x128xf32>
    %17 = math.log1p %12 : vector<16x128xf32>
    %18 = arith.addf %16, %17 : vector<16x128xf32>
    %cst_7 = arith.constant 1.000000e+00 : f32
    %19 = vector.broadcast %cst_7 : f32 to vector<16x128xf32>
    %20 = arith.addf %19, %12 : vector<16x128xf32>
    %21 = tpu.reciprocal %20 {approx = true} : vector<16x128xf32> -> vector<16x128xf32>
    %22 = arith.mulf %20, %21 : vector<16x128xf32>
    %cst_8 = arith.constant 2.000000e+00 : f32
    %23 = vector.broadcast %cst_8 : f32 to vector<16x128xf32>
    %24 = arith.subf %23, %22 : vector<16x128xf32>
    %25 = arith.mulf %21, %24 : vector<16x128xf32>
    %cst_9 = arith.constant 0.000000e+00 : f32
    %26 = vector.broadcast %cst_9 : f32 to vector<16x128xf32>
    %27 = arith.cmpf oge, %4, %26 : vector<16x128xf32>
    %28 = arith.mulf %12, %25 : vector<16x128xf32>
    %29 = arith.select %27, %25, %28 : vector<16x128xi1>, vector<16x128xf32>
    %30 = arith.subf %29, %6 : vector<16x128xf32>
    %31 = arith.mulf %30, %30 : vector<16x128xf32>
    %cst_10 = arith.constant 2.500000e-01 : f32
    %32 = vector.broadcast %cst_10 : f32 to vector<16x128xf32>
    %33 = arith.mulf %32, %31 : vector<16x128xf32>
    %34 = arith.mulf %33, %18 : vector<16x128xf32>
    %35 = arith.subf %8, %29 : vector<16x128xf32>
    %36 = arith.mulf %35, %35 : vector<16x128xf32>
    %37 = arith.mulf %29, %6 : vector<16x128xf32>
    %c0_11 = arith.constant 0 : index
    %c0_12 = arith.constant 0 : index
    %c0_13 = arith.constant 0 : index
    %38 = vector.load %arg6[%c0_11, %c0_12, %c0_13] : memref<1x16x768xf32, #tpu.memory_space<vmem>>, vector<1x16x128xf32>
    %39 = vector.shape_cast %38 : vector<1x16x128xf32> to vector<16x128xf32>
    %40 = vector.shape_cast %18 : vector<16x128xf32> to vector<16x1x128xf32>
    %cst_14 = arith.constant dense<0.000000e+00> : vector<16x128xf32>
    %41 = vector.multi_reduction <add>, %40, %cst_14 [1] : vector<16x1x128xf32> to vector<16x128xf32>
    %42 = arith.addf %39, %41 : vector<16x128xf32>
    %c0_15 = arith.constant 0 : index
    %c0_16 = arith.constant 0 : index
    %c0_17 = arith.constant 0 : index
    %43 = vector.load %arg6[%c0_15, %c0_16, %c0_17] : memref<1x16x768xf32, #tpu.memory_space<vmem>>, vector<1x16x128xf32>
    %44 = vector.shape_cast %43 : vector<1x16x128xf32> to vector<16x128xf32>
    %45 = vector.shape_cast %42 : vector<16x128xf32> to vector<1x16x128xf32>
    tpu.vector_store %arg6[%c0_15, %c0_16, %c0_17], %45 {strides = array<i32>} : memref<1x16x768xf32, #tpu.memory_space<vmem>>, vector<1x16x128xf32>,
    %c0_18 = arith.constant 0 : index
    %c0_19 = arith.constant 0 : index
    %c128 = arith.constant 128 : index
    %46 = vector.load %arg6[%c0_18, %c0_19, %c128] : memref<1x16x768xf32, #tpu.memory_space<vmem>>, vector<1x16x128xf32>
    %47 = vector.shape_cast %46 : vector<1x16x128xf32> to vector<16x128xf32>
    %48 = vector.shape_cast %34 : vector<16x128xf32> to vector<16x1x128xf32>
    %cst_20 = arith.constant dense<0.000000e+00> : vector<16x128xf32>
    %49 = vector.multi_reduction <add>, %48, %cst_20 [1] : vector<16x1x128xf32> to vector<16x128xf32>
    %50 = arith.addf %47, %49 : vector<16x128xf32>
    %c0_21 = arith.constant 0 : index
    %c0_22 = arith.constant 0 : index
    %c128_23 = arith.constant 128 : index
    %51 = vector.load %arg6[%c0_21, %c0_22, %c128_23] : memref<1x16x768xf32, #tpu.memory_space<vmem>>, vector<1x16x128xf32>
    %52 = vector.shape_cast %51 : vector<1x16x128xf32> to vector<16x128xf32>
    %53 = vector.shape_cast %50 : vector<16x128xf32> to vector<1x16x128xf32>
    tpu.vector_store %arg6[%c0_21, %c0_22, %c128_23], %53 {strides = array<i32>} : memref<1x16x768xf32, #tpu.memory_space<vmem>>, vector<1x16x128xf32>,
    %c0_24 = arith.constant 0 : index
    %c0_25 = arith.constant 0 : index
    %c256 = arith.constant 256 : index
    %54 = vector.load %arg6[%c0_24, %c0_25, %c256] : memref<1x16x768xf32, #tpu.memory_space<vmem>>, vector<1x16x128xf32>
    %55 = vector.shape_cast %54 : vector<1x16x128xf32> to vector<16x128xf32>
    %56 = vector.shape_cast %36 : vector<16x128xf32> to vector<16x1x128xf32>
    %cst_26 = arith.constant dense<0.000000e+00> : vector<16x128xf32>
    %57 = vector.multi_reduction <add>, %56, %cst_26 [1] : vector<16x1x128xf32> to vector<16x128xf32>
    %58 = arith.addf %55, %57 : vector<16x128xf32>
    %c0_27 = arith.constant 0 : index
    %c0_28 = arith.constant 0 : index
    %c256_29 = arith.constant 256 : index
    %59 = vector.load %arg6[%c0_27, %c0_28, %c256_29] : memref<1x16x768xf32, #tpu.memory_space<vmem>>, vector<1x16x128xf32>
    %60 = vector.shape_cast %59 : vector<1x16x128xf32> to vector<16x128xf32>
    %61 = vector.shape_cast %58 : vector<16x128xf32> to vector<1x16x128xf32>
    tpu.vector_store %arg6[%c0_27, %c0_28, %c256_29], %61 {strides = array<i32>} : memref<1x16x768xf32, #tpu.memory_space<vmem>>, vector<1x16x128xf32>,
    %c0_30 = arith.constant 0 : index
    %c0_31 = arith.constant 0 : index
    %c384 = arith.constant 384 : index
    %62 = vector.load %arg6[%c0_30, %c0_31, %c384] : memref<1x16x768xf32, #tpu.memory_space<vmem>>, vector<1x16x128xf32>
    %63 = vector.shape_cast %62 : vector<1x16x128xf32> to vector<16x128xf32>
    %64 = vector.shape_cast %37 : vector<16x128xf32> to vector<16x1x128xf32>
    %cst_32 = arith.constant dense<0.000000e+00> : vector<16x128xf32>
    %65 = vector.multi_reduction <add>, %64, %cst_32 [1] : vector<16x1x128xf32> to vector<16x128xf32>
    %66 = arith.addf %63, %65 : vector<16x128xf32>
    %c0_33 = arith.constant 0 : index
    %c0_34 = arith.constant 0 : index
    %c384_35 = arith.constant 384 : index
    %67 = vector.load %arg6[%c0_33, %c0_34, %c384_35] : memref<1x16x768xf32, #tpu.memory_space<vmem>>, vector<1x16x128xf32>
    %68 = vector.shape_cast %67 : vector<1x16x128xf32> to vector<16x128xf32>
    %69 = vector.shape_cast %66 : vector<16x128xf32> to vector<1x16x128xf32>
    tpu.vector_store %arg6[%c0_33, %c0_34, %c384_35], %69 {strides = array<i32>} : memref<1x16x768xf32, #tpu.memory_space<vmem>>, vector<1x16x128xf32>,
    %c0_36 = arith.constant 0 : index
    %c0_37 = arith.constant 0 : index
    %c512 = arith.constant 512 : index
    %70 = vector.load %arg6[%c0_36, %c0_37, %c512] : memref<1x16x768xf32, #tpu.memory_space<vmem>>, vector<1x16x128xf32>
    %71 = vector.shape_cast %70 : vector<1x16x128xf32> to vector<16x128xf32>
    %72 = vector.shape_cast %29 : vector<16x128xf32> to vector<16x1x128xf32>
    %cst_38 = arith.constant dense<0.000000e+00> : vector<16x128xf32>
    %73 = vector.multi_reduction <add>, %72, %cst_38 [1] : vector<16x1x128xf32> to vector<16x128xf32>
    %74 = arith.addf %71, %73 : vector<16x128xf32>
    %c0_39 = arith.constant 0 : index
    %c0_40 = arith.constant 0 : index
    %c512_41 = arith.constant 512 : index
    %75 = vector.load %arg6[%c0_39, %c0_40, %c512_41] : memref<1x16x768xf32, #tpu.memory_space<vmem>>, vector<1x16x128xf32>
    %76 = vector.shape_cast %75 : vector<1x16x128xf32> to vector<16x128xf32>
    %77 = vector.shape_cast %74 : vector<16x128xf32> to vector<1x16x128xf32>
    tpu.vector_store %arg6[%c0_39, %c0_40, %c512_41], %77 {strides = array<i32>} : memref<1x16x768xf32, #tpu.memory_space<vmem>>, vector<1x16x128xf32>,
    %c0_42 = arith.constant 0 : index
    %c0_43 = arith.constant 0 : index
    %c640 = arith.constant 640 : index
    %78 = vector.load %arg6[%c0_42, %c0_43, %c640] : memref<1x16x768xf32, #tpu.memory_space<vmem>>, vector<1x16x128xf32>
    %79 = vector.shape_cast %78 : vector<1x16x128xf32> to vector<16x128xf32>
    %80 = vector.shape_cast %6 : vector<16x128xf32> to vector<16x1x128xf32>
    %cst_44 = arith.constant dense<0.000000e+00> : vector<16x128xf32>
    %81 = vector.multi_reduction <add>, %80, %cst_44 [1] : vector<16x1x128xf32> to vector<16x128xf32>
    %82 = arith.addf %79, %81 : vector<16x128xf32>
    %c0_45 = arith.constant 0 : index
    %c0_46 = arith.constant 0 : index
    %c640_47 = arith.constant 640 : index
    %83 = vector.load %arg6[%c0_45, %c0_46, %c640_47] : memref<1x16x768xf32, #tpu.memory_space<vmem>>, vector<1x16x128xf32>
    %84 = vector.shape_cast %83 : vector<1x16x128xf32> to vector<16x128xf32>
    %85 = vector.shape_cast %82 : vector<16x128xf32> to vector<1x16x128xf32>
    tpu.vector_store %arg6[%c0_45, %c0_46, %c640_47], %85 {strides = array<i32>} : memref<1x16x768xf32, #tpu.memory_space<vmem>>, vector<1x16x128xf32>,
    return
  }
  func.func @transform_0(%arg0: i32, %arg1: i32, %arg2: i32) -> (i32, i32) {
    %c1_i32 = arith.constant 1 : i32
    %0 = arith.muli %arg1, %c1_i32 : i32
    %1 = arith.addi %0, %arg2 : i32
    %c0_i32 = arith.constant 0 : i32
    return %arg0, %1 : i32, i32
  }
  func.func @transform_1(%arg0: i32, %arg1: i32, %arg2: i32) -> (i32, i32) {
    %c1_i32 = arith.constant 1 : i32
    %0 = arith.muli %arg1, %c1_i32 : i32
    %1 = arith.addi %0, %arg2 : i32
    %c0_i32 = arith.constant 0 : i32
    return %arg0, %1 : i32, i32
  }
  func.func @transform_2(%arg0: i32, %arg1: i32, %arg2: i32) -> (i32, i32) {
    %c1_i32 = arith.constant 1 : i32
    %0 = arith.muli %arg1, %c1_i32 : i32
    %1 = arith.addi %0, %arg2 : i32
    %c0_i32 = arith.constant 0 : i32
    return %arg0, %1 : i32, i32
  }
  func.func @transform_3(%arg0: i32, %arg1: i32, %arg2: i32) -> (i32, i32, i32) {
    %c0_i32 = arith.constant 0 : i32
    %c0_i32_0 = arith.constant 0 : i32
    return %arg1, %arg0, %c0_i32 : i32, i32, i32
  }
}

</mosaic_0001>

<llo_original>
// kernel: tpu_custom_call.1
$region0: #{tpu_custom_call.1}
  #allocation0 [shape = 'u32[]', space=smem, size = 0x4, offset = 0x4, fixed_abs, tag = 'smem constant byte address 0x4 - core index']
  #allocation1 [shape = 'u32[144,128]{1,0:T(1,128)}', space=vmem, size = 0x12000, scoped, tag = 'internal scratch']
  %s0 = inlined_call_operand.hbm [shape: bf16[16,256], index: 0, kind: input, shape index: {}]
  %s1 = inlined_call_operand.hbm [shape: bf16[16,256], index: 1, kind: input, shape index: {}]
  %s2 = inlined_call_operand.hbm [shape: bf16[16,256], index: 2, kind: input, shape index: {}]
  %s3 = inlined_call_operand.hbm [shape: f32[2,16,768], index: 3, kind: output, shape index: {}]
  %s4 = sld [smem:[#allocation0]]
  $region61: #{tpu_custom_call.1} parent=0
    _
  %s6 = ssub.s32 1, %s4
  %s7 = scalar_select 0, %s6, %s4
  $region1: #{tpu_custom_call.1} parent=0
    #allocation2 [shape = 'u8[8192]{0}', space=vmem, size = 0x2000, scoped, tag = 'input window, operand 0']
    #allocation3 [shape = 's32[2]{0}', space=sflag, size = 0x8, scoped, tag = 'scoped memory for tpu_custom_call.1']
    #allocation4 [shape = 's32[2]{0}', space=sflag, size = 0x8, scoped, tag = 'scoped memory for tpu_custom_call.1']
    #allocation5 [shape = 'u8[8192]{0}', space=vmem, size = 0x2000, scoped, tag = 'input window, operand 1']
    #allocation6 [shape = 's32[2]{0}', space=sflag, size = 0x8, scoped, tag = 'scoped memory for tpu_custom_call.1']
    #allocation7 [shape = 'u8[8192]{0}', space=vmem, size = 0x2000, scoped, tag = 'input window, operand 2']
    #allocation8 [shape = 'u8[98304]{0}', space=vmem, size = 0x18000, scoped, tag = 'output window, operand 0']
    %8 = vsyncpa [#allocation3], 0
    %s9 = scalar_lea.sflag [#allocation3], 1
    %10 = vsyncpa %s9, 0
    %11 = vsyncpa [#allocation6], 0
    %s12 = scalar_lea.sflag [#allocation6], 1
    %13 = vsyncpa %s12, 0
    %14 = vsyncpa [#allocation4], 0
    %s15 = scalar_lea.sflag [#allocation4], 1
    %16 = vsyncpa %s15, 0
    loop: start=0, step=1, limit=4
    $region2: #{tpu_custom_call.1} parent=1 // loop_pre_header
      _
    $region3: #{tpu_custom_call.1} parent=1 // loop_header
      %s18 = sphi 0, %s22
      %p19 = scmp.ge.s32.totalorder %s18, 4
      %s25 = sphi 0, %s44
      %s26 = sphi 0, %s40
      %s27 = sphi 0, %s36
      %s28 = sphi 0, %s25
      %s29 = sphi 0, %s26
      %s30 = sphi 0, %s27
      %s31 = sphi 0, %s28
      %s32 = sphi 0, %s29
      %s33 = sphi 0, %s30
      %s51 = sphi 0, %s53
      %s54 = sphi 0, %s51
      %s55 = sphi 0, %s54
      %s71 = sphi 0, %s55
      %s81 = sphi 0, %s83
      %s84 = sphi 0, %s81
      %s85 = sphi 0, %s84
      %s101 = sphi 0, %s85
      %s111 = sphi 0, %s113
      %s114 = sphi 0, %s111
      %s115 = sphi 0, %s114
      %s131 = sphi 0, %s115
      %s139 = sphi 0, %s141
      %s142 = sphi 0, %s139
      %s143 = sphi 0, %s142
      %s159 = sphi 0, %s143
    $region4: #{tpu_custom_call.1} parent=1 // loop_header_branch
      %21 = sbr.rel (%p19) target = $region8
    $region5: #{tpu_custom_call.1} parent=1 // loop_body
      %s23 = ssub.s32 %s18, 1
      %s24 = ssub.s32 %s18, 2
      %s34 = sadd.s32 1, %s27
      %p35 = scmp.ge.s32.totalorder %s34, 1
      %s36 = scalar_select %p35, 0, %s34
      %s37 = sadd.s32 1, %s26
      %s38 = scalar_select %p35, %s37, %s26
      %p39 = scmp.ge.s32.totalorder %s38, 2
      %s40 = scalar_select %p39, 0, %s38
      %s41 = sadd.s32 1, %s25
      %s42 = scalar_select %p39, %s41, %s25
      %p43 = scmp.ge.s32.totalorder %s42, 1
      %s44 = scalar_select %p43, 0, %s42
      %s45 = sadd.s32 %s26, %s27
      %s46 = sadd.s32 %s40, %s36
      %s47 = ssub.s32 %s25, %s44
      %s48 = ssub.s32 %s45, %s46
      %s49 = sor.u32 %s47, %s48
      %p50 = scmp.eq.s32.totalorder %s49, 0
      %s52 = sadd.s32 %s51, 1
      %s53 = scalar_select %p50, %s51, %s52
      %p56 = pneg %p50
      %p57 = scmp.eq.s32.totalorder %s18, 1
      %p58 = por %p56, %p57
      %p59 = scmp.ne.s32.totalorder %s51, %s54
      %p60 = scmp.eq.s32.totalorder %s18, 0
      %p61 = por %p59, %p60
      %p62 = scmp.ne.s32.totalorder %s51, %s54
      %p63 = scmp.eq.s32.totalorder %s23, 1
      %p64 = por %p62, %p63
      %p65 = scmp.ne.s32.totalorder %s54, %s55
      %p66 = scmp.eq.s32.totalorder %s23, 0
      %p67 = por %p65, %p66
      %p68 = scmp.ne.s32.totalorder %s54, %s55
      %p69 = scmp.eq.s32.totalorder %s24, 1
      %p70 = por %p68, %p69
      %p72 = scmp.ne.s32.totalorder %s55, %s71
      %p73 = scmp.eq.s32.totalorder %s24, 0
      %p74 = por %p72, %p73
      %s75 = sadd.s32 %s26, %s27
      %s76 = sadd.s32 %s40, %s36
      %s77 = ssub.s32 %s25, %s44
      %s78 = ssub.s32 %s75, %s76
      %s79 = sor.u32 %s77, %s78
      %p80 = scmp.eq.s32.totalorder %s79, 0
      %s82 = sadd.s32 %s81, 1
      %s83 = scalar_select %p80, %s81, %s82
      %p86 = pneg %p80
      %p87 = scmp.eq.s32.totalorder %s18, 1
      %p88 = por %p86, %p87
      %p89 = scmp.ne.s32.totalorder %s81, %s84
      %p90 = scmp.eq.s32.totalorder %s18, 0
      %p91 = por %p89, %p90
      %p92 = scmp.ne.s32.totalorder %s81, %s84
      %p93 = scmp.eq.s32.totalorder %s23, 1
      %p94 = por %p92, %p93
      %p95 = scmp.ne.s32.totalorder %s84, %s85
      %p96 = scmp.eq.s32.totalorder %s23, 0
      %p97 = por %p95, %p96
      %p98 = scmp.ne.s32.totalorder %s84, %s85
      %p99 = scmp.eq.s32.totalorder %s24, 1
      %p100 = por %p98, %p99
      %p102 = scmp.ne.s32.totalorder %s85, %s101
      %p103 = scmp.eq.s32.totalorder %s24, 0
      %p104 = por %p102, %p103
      %s105 = sadd.s32 %s26, %s27
      %s106 = sadd.s32 %s40, %s36
      %s107 = ssub.s32 %s25, %s44
      %s108 = ssub.s32 %s105, %s106
      %s109 = sor.u32 %s107, %s108
      %p110 = scmp.eq.s32.totalorder %s109, 0
      %s112 = sadd.s32 %s111, 1
      %s113 = scalar_select %p110, %s111, %s112
      %p116 = pneg %p110
      %p117 = scmp.eq.s32.totalorder %s18, 1
      %p118 = por %p116, %p117
      %p119 = scmp.ne.s32.totalorder %s111, %s114
      %p120 = scmp.eq.s32.totalorder %s18, 0
      %p121 = por %p119, %p120
      %p122 = scmp.ne.s32.totalorder %s111, %s114
      %p123 = scmp.eq.s32.totalorder %s23, 1
      %p124 = por %p122, %p123
      %p125 = scmp.ne.s32.totalorder %s114, %s115
      %p126 = scmp.eq.s32.totalorder %s23, 0
      %p127 = por %p125, %p126
      %p128 = scmp.ne.s32.totalorder %s114, %s115
      %p129 = scmp.eq.s32.totalorder %s24, 1
      %p130 = por %p128, %p129
      %p132 = scmp.ne.s32.totalorder %s115, %s131
      %p133 = scmp.eq.s32.totalorder %s24, 0
      %p134 = por %p132, %p133
      %s135 = ssub.s32 %s26, %s40
      %s136 = ssub.s32 %s25, %s44
      %s137 = sor.u32 %s135, %s136
      %p138 = scmp.eq.s32.totalorder %s137, 0
      %s140 = sadd.s32 %s139, 1
      %s141 = scalar_select %p138, %s139, %s140
      %p144 = pneg %p138
      %p145 = scmp.eq.s32.totalorder %s18, 1
      %p146 = por %p144, %p145
      %p147 = scmp.ne.s32.totalorder %s139, %s142
      %p148 = scmp.eq.s32.totalorder %s18, 0
      %p149 = por %p147, %p148
      %p150 = scmp.ne.s32.totalorder %s139, %s142
      %p151 = scmp.eq.s32.totalorder %s23, 1
      %p152 = por %p150, %p151
      %p153 = scmp.ne.s32.totalorder %s142, %s143
      %p154 = scmp.eq.s32.totalorder %s23, 0
      %p155 = por %p153, %p154
      %p156 = scmp.ne.s32.totalorder %s142, %s143
      %p157 = scmp.eq.s32.totalorder %s24, 1
      %p158 = por %p156, %p157
      %p160 = scmp.ne.s32.totalorder %s143, %s159
      %p161 = scmp.eq.s32.totalorder %s24, 0
      %p162 = por %p160, %p161
      %p163 = scmp.le.s32.totalorder 1, %s18
      %p164 = scmp.lt.s32.totalorder %s18, 3
      %p165 = pnand %p163, %p164
      %p166 = pneg %p165
      // Predicated region
      $region9: #{tpu_custom_call.1} parent=5 // pred_check
        _
      $region10: #{tpu_custom_call.1} parent=5 // pred_check_branch
        %168 = sbr.rel (%p165) target = $region12
      $region11: #{tpu_custom_call.1} parent=5 // pred_region
        %s169 = ssub.s32 %s18, 1
      $region12: #{tpu_custom_call.1} parent=5 // pred_fallthru
        _
      %p170 = scmp.lt.s32.totalorder %s18, 2
      // Predicated region
      $region13: #{tpu_custom_call.1} parent=5 // pred_check
        %p171 = pneg %p170
      $region14: #{tpu_custom_call.1} parent=5 // pred_check_branch
        %173 = sbr.rel (%p171) target = $region16
      $region15: #{tpu_custom_call.1} parent=5 // pred_region
        // Predicated region
        $region17: #{tpu_custom_call.1} parent=15 // pred_check
          %p174 = pneg %p61
        $region18: #{tpu_custom_call.1} parent=15 // pred_check_branch
          %176 = sbr.rel (%p174) target = $region20
        $region19: #{tpu_custom_call.1} parent=15 // pred_region
          %s177 = sand.u32 %s51, 1
          %s178 = scalar_lea.sflag [#allocation3], %s177
          %s179 = sand.u32 %s51, 1
          %s180 = smul.addr %s179, 8
          %s181 = scalar_lea.vmem [#allocation2], %s180
          %s182 = sadd.s32 %s26, %s27
          %s183 = smul.u32 2, %s25
          %s185 = ssub.s32 128, 128
          %186 = vsyncadd %s178, %s185
          %s187 = smul.addr %s183, 2
          %s188 = sadd.s32 %s182, %s187
          %s189 = smul.addr %s188, 64
          %s190 = scalar_lea.hbm %s0, %s189
          %s191 = sshll.u32 %s181, 4
          %s192 = int_to_ptr.vmem [resolvable:$true] %s191
          %197 = dma.hbm_to_vmem [thread:$0]  %s190, 128, %s192, %s178, 128, 64, 4
        $region20: #{tpu_custom_call.1} parent=15 // pred_fallthru
          _
        // Predicated region
        $region21: #{tpu_custom_call.1} parent=15 // pred_check
          %p198 = pneg %p91
        $region22: #{tpu_custom_call.1} parent=15 // pred_check_branch
          %200 = sbr.rel (%p198) target = $region24
        $region23: #{tpu_custom_call.1} parent=15 // pred_region
          %s201 = sand.u32 %s18, 1
          %s202 = scalar_lea.sflag [#allocation6], %s201
          %s203 = sand.u32 %s81, 1
          %s204 = smul.addr %s203, 8
          %s205 = scalar_lea.vmem [#allocation5], %s204
          %s206 = sadd.s32 %s26, %s27
          %s207 = smul.u32 2, %s25
          %s209 = ssub.s32 128, 128
          %210 = vsyncadd %s202, %s209
          %s211 = smul.addr %s207, 2
          %s212 = sadd.s32 %s206, %s211
          %s213 = smul.addr %s212, 64
          %s214 = scalar_lea.hbm %s1, %s213
          %s215 = sshll.u32 %s205, 4
          %s216 = int_to_ptr.vmem [resolvable:$true] %s215
          %221 = dma.hbm_to_vmem [thread:$0]  %s214, 128, %s216, %s202, 128, 64, 4
        $region24: #{tpu_custom_call.1} parent=15 // pred_fallthru
          _
        // Predicated region
        $region25: #{tpu_custom_call.1} parent=15 // pred_check
          %p222 = pneg %p121
        $region26: #{tpu_custom_call.1} parent=15 // pred_check_branch
          %224 = sbr.rel (%p222) target = $region28
        $region27: #{tpu_custom_call.1} parent=15 // pred_region
          %s225 = sand.u32 %s18, 1
          %s226 = scalar_lea.sflag [#allocation6], %s225
          %s227 = sand.u32 %s111, 1
          %s228 = smul.addr %s227, 8
          %s229 = scalar_lea.vmem [#allocation7], %s228
          %s230 = sadd.s32 %s26, %s27
          %s231 = smul.u32 2, %s25
          %s233 = ssub.s32 128, 128
          %234 = vsyncadd %s226, %s233
          %s235 = smul.addr %s231, 2
          %s236 = sadd.s32 %s230, %s235
          %s237 = smul.addr %s236, 64
          %s238 = scalar_lea.hbm %s2, %s237
          %s239 = sshll.u32 %s229, 4
          %s240 = int_to_ptr.vmem [resolvable:$true] %s239
          %245 = dma.hbm_to_vmem [thread:$0]  %s238, 128, %s240, %s226, 128, 64, 4
        $region28: #{tpu_custom_call.1} parent=15 // pred_fallthru
          _
      $region16: #{tpu_custom_call.1} parent=5 // pred_fallthru
        _
      %p246 = scmp.le.s32.totalorder 1, %s18
      %p247 = scmp.lt.s32.totalorder %s18, 3
      %p248 = pnand %p246, %p247
      %p249 = pneg %p248
      // Predicated region
      $region29: #{tpu_custom_call.1} parent=5 // pred_check
        _
      $region30: #{tpu_custom_call.1} parent=5 // pred_check_branch
        %251 = sbr.rel (%p248) target = $region32
      $region31: #{tpu_custom_call.1} parent=5 // pred_region
        %s252 = ssub.s32 %s18, 1
        %s253 = sand.u32 %s54, 1
        %s254 = scalar_lea.sflag [#allocation3], %s253
        %s255 = sand.u32 %s54, 1
        %s256 = smul.addr %s255, 8
        %s257 = scalar_lea.vmem [#allocation2], %s256
        // Predicated region
        $region33: #{tpu_custom_call.1} parent=31 // pred_check
          %p258 = pneg %p67
        $region34: #{tpu_custom_call.1} parent=31 // pred_check_branch
          %260 = sbr.rel (%p258) target = $region36
        $region35: #{tpu_custom_call.1} parent=31 // pred_region
          %261 = dma.done %s254, 128
        $region36: #{tpu_custom_call.1} parent=31 // pred_fallthru
          _
        %s262 = sand.u32 %s23, 1
        %s263 = scalar_lea.sflag [#allocation6], %s262
        %s264 = sand.u32 %s84, 1
        %s265 = smul.addr %s264, 8
        %s266 = scalar_lea.vmem [#allocation5], %s265
        // Predicated region
        $region37: #{tpu_custom_call.1} parent=31 // pred_check
          %p267 = pneg %p97
        $region38: #{tpu_custom_call.1} parent=31 // pred_check_branch
          %269 = sbr.rel (%p267) target = $region40
        $region39: #{tpu_custom_call.1} parent=31 // pred_region
          %270 = dma.done %s263, 128
        $region40: #{tpu_custom_call.1} parent=31 // pred_fallthru
          _
        %s271 = sand.u32 %s23, 1
        %s272 = scalar_lea.sflag [#allocation6], %s271
        %s273 = sand.u32 %s114, 1
        %s274 = smul.addr %s273, 8
        %s275 = scalar_lea.vmem [#allocation7], %s274
        // Predicated region
        $region41: #{tpu_custom_call.1} parent=31 // pred_check
          %p276 = pneg %p127
        $region42: #{tpu_custom_call.1} parent=31 // pred_check_branch
          %278 = sbr.rel (%p276) target = $region44
        $region43: #{tpu_custom_call.1} parent=31 // pred_region
          %279 = dma.done %s272, 128
        $region44: #{tpu_custom_call.1} parent=31 // pred_fallthru
          _
        %s280 = sand.u32 %s54, 1
        %s281 = scalar_lea.sflag [#allocation3], %s280
        %s282 = sand.u32 %s54, 1
        %s283 = smul.addr %s282, 8
        %s284 = scalar_lea.vmem [#allocation2], %s283
        %p285 = pneg %p67
        %p286 = pneg %p64
        %s287 = sand.u32 %s23, 1
        %s288 = scalar_lea.sflag [#allocation6], %s287
        %s289 = sand.u32 %s84, 1
        %s290 = smul.addr %s289, 8
        %s291 = scalar_lea.vmem [#allocation5], %s290
        %p292 = pneg %p97
        %p293 = pneg %p94
        %s294 = sand.u32 %s23, 1
        %s295 = scalar_lea.sflag [#allocation6], %s294
        %s296 = sand.u32 %s114, 1
        %s297 = smul.addr %s296, 8
        %s298 = scalar_lea.vmem [#allocation7], %s297
        %p299 = pneg %p127
        %p300 = pneg %p124
        %p301 = pneg %p155
        %p302 = pneg %p152
        %s303 = sand.u32 %s142, 1
        %s304 = scalar_lea.sflag [#allocation4], %s303
        %s305 = sand.u32 %s142, 1
        %s306 = smul.addr %s305, 96
        %s307 = scalar_lea.vmem [#allocation8], %s306
        %s308 = sadd.s32 %s29, %s30
        %s309 = smul.u32 2, %s28
        %s310 = sadd.s32 %s29, %s30
        %s311 = smul.u32 2, %s28
        %s312 = sadd.s32 %s29, %s30
        %s313 = smul.u32 2, %s28
        %s314 = smul.u32 2, %s28
        %p315 = scmp.eq.s32.totalorder %s30, 0
        // Predicated region
        $region45: #{tpu_custom_call.1} parent=31 // pred_check
          %p316 = pneg %p315
        $region46: #{tpu_custom_call.1} parent=31 // pred_check_branch
          %318 = sbr.rel (%p316) target = $region48
        $region47: #{tpu_custom_call.1} parent=31 // pred_region
          %319 = vst [vmem:[%s307] sm:$0xff] 0.0
          %320 = vst [vmem:[%s307 + $0x8] sm:$0xff] 0.0
          %321 = vst [vmem:[%s307 + $0x10] sm:$0xff] 0.0
          %322 = vst [vmem:[%s307 + $0x18] sm:$0xff] 0.0
          %323 = vst [vmem:[%s307 + $0x20] sm:$0xff] 0.0
          %324 = vst [vmem:[%s307 + $0x28] sm:$0xff] 0.0
          %325 = vst [vmem:[%s307 + $0x30] sm:$0xff] 0.0
          %326 = vst [vmem:[%s307 + $0x38] sm:$0xff] 0.0
          %327 = vst [vmem:[%s307 + $0x40] sm:$0xff] 0.0
          %328 = vst [vmem:[%s307 + $0x48] sm:$0xff] 0.0
          %329 = vst [vmem:[%s307 + $0x50] sm:$0xff] 0.0
          %330 = vst [vmem:[%s307 + $0x58] sm:$0xff] 0.0
        $region48: #{tpu_custom_call.1} parent=31 // pred_fallthru
          _
        %v331 = vld [vmem:[%s257] sm:$0xf]
        %v332 = vld [vmem:[%s257 + $0x4] sm:$0xf]
        %v333 = vunpack.c.l.bf16 %v331
        %v334 = vunpack.c.l.bf16 %v332
        %v335 = vld [vmem:[%s266] sm:$0xf]
        %v336 = vld [vmem:[%s266 + $0x4] sm:$0xf]
        %v337 = vunpack.c.l.bf16 %v335
        %v338 = vunpack.c.l.bf16 %v336
        %v339 = vld [vmem:[%s275] sm:$0xf]
        %v340 = vld [vmem:[%s275 + $0x4] sm:$0xf]
        %v341 = vunpack.c.l.bf16 %v339
        %v342 = vunpack.c.l.bf16 %v340
        %v343 = vand.u32 2147483647, %v333
        %v344 = vand.u32 2147483647, %v334
        %v345 = vsub.f32 0.0, %v343
        %v346 = vsub.f32 0.0, %v344
        %v347 = vmul.f32 %v345, 1.442695
        %v348 = vpow.pop %v347
        %v349 = vmul.f32 %v346, 1.442695
        %v350 = vpow.pop %v349
        %v351 = vmax.f32 %v333, 0.0
        %v352 = vmax.f32 %v334, 0.0
        %v353 = vmul.f32 %v333, %v337
        %v354 = vmul.f32 %v334, %v338
        %v355 = vsub.f32 %v351, %v353
        %v356 = vsub.f32 %v352, %v354
        %v357 = vadd.f32 %v348, 1.0
        %v358 = vlog2.pop %v357
        %v359 = vmul.f32 %v358, 0.6931472
        %v360 = vmul.f32 -0.5, %v348
        %v361 = vadd.f32 %v360, 1.0
        %v362 = vmul.f32 %v361, %v348
        %v363 = vand.u32 2147483647, %v348
        %vm364 = vcmp.lt.f32.partialorder %v363, 0.0004427343
        %v365 = vsel %vm364, %v362, %v359
        %v366 = vadd.f32 %v350, 1.0
        %v367 = vlog2.pop %v366
        %v368 = vmul.f32 %v367, 0.6931472
        %v369 = vmul.f32 -0.5, %v350
        %v370 = vadd.f32 %v369, 1.0
        %v371 = vmul.f32 %v370, %v350
        %v372 = vand.u32 2147483647, %v350
        %vm373 = vcmp.lt.f32.partialorder %v372, 0.0004427343
        %v374 = vsel %vm373, %v371, %v368
        %v375 = vadd.f32 %v355, %v365
        %v376 = vadd.f32 %v356, %v374
        %v377 = vadd.f32 %v348, 1.0
        %v378 = vadd.f32 %v350, 1.0
        %v379 = vrcp.pop %v377
        %v380 = vrcp.pop %v378
        %v381 = vmul.f32 %v377, %v379
        %v382 = vmul.f32 %v378, %v380
        %v383 = vsub.f32 2.0, %v381
        %v384 = vsub.f32 2.0, %v382
        %v385 = vmul.f32 %v379, %v383
        %v386 = vmul.f32 %v380, %v384
        %vm387 = vcmp.ge.f32.partialorder %v333, 0.0
        %vm388 = vcmp.ge.f32.partialorder %v334, 0.0
        %v389 = vmul.f32 %v348, %v385
        %v390 = vmul.f32 %v350, %v386
        %v391 = vsel %vm387, %v385, %v389
        %v392 = vsel %vm388, %v386, %v390
        %v393 = vsub.f32 %v391, %v337
        %v394 = vsub.f32 %v392, %v338
        %v395 = vmul.f32 %v393, %v393
        %v396 = vmul.f32 %v394, %v394
        %v397 = vmul.f32 %v395, 0.25
        %v398 = vmul.f32 %v396, 0.25
        %v399 = vmul.f32 %v397, %v375
        %v400 = vmul.f32 %v398, %v376
        %v401 = vsub.f32 %v341, %v391
        %v402 = vsub.f32 %v342, %v392
        %v403 = vmul.f32 %v401, %v401
        %v404 = vmul.f32 %v402, %v402
        %v405 = vmul.f32 %v391, %v337
        %v406 = vmul.f32 %v392, %v338
        %v407 = vld [vmem:[%s307] sm:$0xff]
        %v408 = vld [vmem:[%s307 + $0x30] sm:$0xff]
        %v409 = vadd.f32 %v375, 0.0
        %v410 = vadd.f32 %v376, 0.0
        %v411 = vadd.f32 %v407, %v409
        %v412 = vadd.f32 %v408, %v410
        %413 = vst [vmem:[%s307] sm:$0xff] %v411
        %414 = vst [vmem:[%s307 + $0x30] sm:$0xff] %v412
        %v415 = vld [vmem:[%s307 + $0x8] sm:$0xff]
        %v416 = vld [vmem:[%s307 + $0x38] sm:$0xff]
        %v417 = vadd.f32 %v399, 0.0
        %v418 = vadd.f32 %v400, 0.0
        %v419 = vadd.f32 %v415, %v417
        %v420 = vadd.f32 %v416, %v418
        %421 = vst [vmem:[%s307 + $0x8] sm:$0xff] %v419
        %422 = vst [vmem:[%s307 + $0x38] sm:$0xff] %v420
        %v423 = vld [vmem:[%s307 + $0x10] sm:$0xff]
        %v424 = vld [vmem:[%s307 + $0x40] sm:$0xff]
        %v425 = vadd.f32 %v403, 0.0
        %v426 = vadd.f32 %v404, 0.0
        %v427 = vadd.f32 %v423, %v425
        %v428 = vadd.f32 %v424, %v426
        %429 = vst [vmem:[%s307 + $0x10] sm:$0xff] %v427
        %430 = vst [vmem:[%s307 + $0x40] sm:$0xff] %v428
        %v431 = vld [vmem:[%s307 + $0x18] sm:$0xff]
        %v432 = vld [vmem:[%s307 + $0x48] sm:$0xff]
        %v433 = vadd.f32 %v405, 0.0
        %v434 = vadd.f32 %v406, 0.0
        %v435 = vadd.f32 %v431, %v433
        %v436 = vadd.f32 %v432, %v434
        %437 = vst [vmem:[%s307 + $0x18] sm:$0xff] %v435
        %438 = vst [vmem:[%s307 + $0x48] sm:$0xff] %v436
        %v439 = vld [vmem:[%s307 + $0x20] sm:$0xff]
        %v440 = vld [vmem:[%s307 + $0x50] sm:$0xff]
        %v441 = vadd.f32 %v391, 0.0
        %v442 = vadd.f32 %v392, 0.0
        %v443 = vadd.f32 %v439, %v441
        %v444 = vadd.f32 %v440, %v442
        %445 = vst [vmem:[%s307 + $0x20] sm:$0xff] %v443
        %446 = vst [vmem:[%s307 + $0x50] sm:$0xff] %v444
        %v447 = vld [vmem:[%s307 + $0x28] sm:$0xff]
        %v448 = vld [vmem:[%s307 + $0x58] sm:$0xff]
        %v449 = vadd.f32 %v337, 0.0
        %v450 = vadd.f32 %v338, 0.0
        %v451 = vadd.f32 %v447, %v449
        %v452 = vadd.f32 %v448, %v450
        %453 = vst [vmem:[%s307 + $0x28] sm:$0xff] %v451
        %454 = vst [vmem:[%s307 + $0x58] sm:$0xff] %v452
        %s455 = sand.u32 %s142, 1
        %s456 = scalar_lea.sflag [#allocation4], %s455
        %s457 = sand.u32 %s142, 1
        %s458 = smul.addr %s457, 96
        %s459 = scalar_lea.vmem [#allocation8], %s458
        // Predicated region
        $region49: #{tpu_custom_call.1} parent=31 // pred_check
          %p460 = pneg %p152
        $region50: #{tpu_custom_call.1} parent=31 // pred_check_branch
          %462 = sbr.rel (%p460) target = $region52
        $region51: #{tpu_custom_call.1} parent=31 // pred_region
          %s463 = smul.u32 2, %s28
          %s465 = ssub.s32 1536, 1536
          %466 = vsyncadd %s456, %s465
          %s467 = smul.addr %s463, 6
          %s468 = smul.addr %s29, 12
          %s469 = sadd.s32 %s467, %s468
          %s470 = smul.addr %s469, 128
          %s471 = scalar_lea.hbm %s3, %s470
          %s472 = sshll.u32 %s459, 4
          %s473 = int_to_ptr.vmem [resolvable:$true] %s472
          %478 = dma.vmem_to_hbm [thread:$0]  %s473, 1536, %s471, %s456, 768, 768, 48
        $region52: #{tpu_custom_call.1} parent=31 // pred_fallthru
          _
      $region32: #{tpu_custom_call.1} parent=5 // pred_fallthru
        _
      %p479 = scmp.le.s32.totalorder 2, %s18
      // Predicated region
      $region53: #{tpu_custom_call.1} parent=5 // pred_check
        %p480 = pneg %p479
      $region54: #{tpu_custom_call.1} parent=5 // pred_check_branch
        %482 = sbr.rel (%p480) target = $region56
      $region55: #{tpu_custom_call.1} parent=5 // pred_region
        %s483 = ssub.s32 %s18, 2
        // Predicated region
        $region57: #{tpu_custom_call.1} parent=55 // pred_check
          %p484 = pneg %p158
        $region58: #{tpu_custom_call.1} parent=55 // pred_check_branch
          %486 = sbr.rel (%p484) target = $region60
        $region59: #{tpu_custom_call.1} parent=55 // pred_region
          %s487 = sand.u32 %s143, 1
          %s488 = scalar_lea.sflag [#allocation4], %s487
          %s489 = sand.u32 %s143, 1
          %s490 = smul.addr %s489, 96
          %s491 = scalar_lea.vmem [#allocation8], %s490
          %492 = dma.done %s488, 1536
        $region60: #{tpu_custom_call.1} parent=55 // pred_fallthru
          _
      $region56: #{tpu_custom_call.1} parent=5 // pred_fallthru
        _
    $region6: #{tpu_custom_call.1} parent=1 // loop_footer
      %s22 = sadd.s32 1, %s18
    $region7: #{tpu_custom_call.1} parent=1 // loop_footer_branch
      %17 = sbr.rel target = $region3
    $region8: #{tpu_custom_call.1} parent=1 // loop_exit
      _
    %493 = vsyncpa [#allocation3], 1
    %s494 = scalar_lea.sflag [#allocation3], 1
    %495 = vsyncpa %s494, 1
    %496 = vsyncpa [#allocation6], 1
    %s497 = scalar_lea.sflag [#allocation6], 1
    %498 = vsyncpa %s497, 1
    %499 = vsyncpa [#allocation4], 1
    %s500 = scalar_lea.sflag [#allocation4], 1
    %501 = vsyncpa %s500, 1

</llo_original>
